<compile_context>
chip_gen: v6e
topology: v6e:2x2x1
jax: 0.10.0
libtpu: 0.0.40
codegen_flags: <defaults>
</compile_context>

<pallas_src>
import jax
import jax.numpy as jnp
from jax import lax
from jax.experimental import pallas as pl
from jax.experimental.pallas import tpu as pltpu


def _round_up(x, m):
    return ((x + m - 1) // m) * m


def _conv_in_kernel(w_ref, x_ref, o_ref):
    """One grid step = one (Cout, tn) output tile for one batch element.

    w_ref : (Cout, KA)  bf16 folded conv weights (+ bias column, + zero pad rows)
    x_ref : (KA, tn)    bf16 im2col columns (+ ones row for the bias, + zero pad)
    o_ref : (Cout, tn)  output tile (f32 or bf16)
    """
    o_ref[...] = jnp.dot(
        w_ref[...], x_ref[...], preferred_element_type=jnp.float32
    ).astype(o_ref.dtype)


def conv_in_pallas(x_nchw, weight, bias, *, tn=2048, out_dtype=None):
    """3x3 stride-1 pad-1 conv with the semantics of nn.Conv2d(Cin, Cout, 3, padding=1).

    x_nchw : (B, Cin, H, W) float32
    weight : (Cout, Cin, 3, 3) float32 (PyTorch OIHW)
    bias   : (Cout,) float32
    returns: (B, Cout, H, W) out_dtype (default: x_nchw.dtype) -- NCHW, no transpose.
    """
    B, Cin, H, W = x_nchw.shape
    Cout = weight.shape[0]
    K = 9 * Cin                       # 36 taps*channels
    KA = _round_up(K + 1, 8)          # + 1 bias lane, padded to a multiple of 8 (= 40)
    HW = H * W
    out_dtype = x_nchw.dtype if out_dtype is None else out_dtype

    # Tile over the H*W axis; clamp to the (128-aligned) problem size so small
    # inputs don't over-pad, and keep tn a multiple of 128 for lane-dense stores.
    tn_eff = min(tn, _round_up(HW, 128))
    HWp = _round_up(HW, tn_eff)

    # ---- plain-JAX glue: bf16 cast FIRST, then im2col directly from NCHW ----
    xb = x_nchw.astype(jnp.bfloat16)                               # cast before im2col
    xp = jnp.pad(xb, ((0, 0), (0, 0), (1, 1), (1, 1)))             # pad H, W by 1
    taps = [
        xp[:, :, kh:kh + H, kw:kw + W].reshape(B, Cin, HW)
        for kh in range(3) for kw in range(3)
    ]                                                              # 9 x (B, Cin, HW)
    ones = jnp.ones((B, 1, HW), jnp.bfloat16)                      # bias lane
    zpad = jnp.zeros((B, KA - K - 1, HW), jnp.bfloat16)            # sublane alignment
    cols = jnp.concatenate(taps + [ones, zpad], axis=1)            # (B, KA, HW)
    if HWp != HW:
        cols = jnp.pad(cols, ((0, 0), (0, 0), (0, HWp - HW)))      # (B, KA, HWp)

    # weight[o, c, kh, kw] -> w_fold[o, (kh*3+kw)*Cin + c]  (matches the tap concat
    # order above), then append the bias column and zero pad rows.
    w_fold = jnp.transpose(weight, (0, 2, 3, 1)).reshape(Cout, K)
    w_aug = jnp.concatenate(
        [w_fold, bias.reshape(Cout, 1), jnp.zeros((Cout, KA - K - 1), weight.dtype)],
        axis=1,
    ).astype(jnp.bfloat16)                                         # (Cout, KA)

    # ---- Pallas: per-batch (Cout, KA) x (KA, tn) GEMM, output already NCHW ----
    out3 = pl.pallas_call(
        _conv_in_kernel,
        out_shape=jax.ShapeDtypeStruct((B, Cout, HWp), out_dtype),
        grid_spec=pltpu.PrefetchScalarGridSpec(
            num_scalar_prefetch=0,
            grid=(B, HWp // tn_eff),
            in_specs=[
                pl.BlockSpec((Cout, KA), lambda b, j: (0, 0)),
                pl.BlockSpec((None, KA, tn_eff), lambda b, j: (b, 0, j)),
            ],
            out_specs=pl.BlockSpec((None, Cout, tn_eff), lambda b, j: (b, 0, j)),
        ),
        compiler_params=pltpu.CompilerParams(
            dimension_semantics=("parallel", "parallel"),
        ),
    )(w_aug, cols)

    out = out3[:, :, :HW] if HWp != HW else out3
    return out.reshape(B, Cout, H, W)


def conv_in_reference(x_nchw, weight, bias):
    """Pure-JAX reference with the SAME bf16 rounding of x / weight / bias
    (f32 accumulation), so only accumulation-order differences remain."""
    xb = x_nchw.astype(jnp.bfloat16).astype(jnp.float32)
    wb = weight.astype(jnp.bfloat16).astype(jnp.float32)
    bb = bias.astype(jnp.bfloat16).astype(jnp.float32)
    out = lax.conv_general_dilated(
        xb,
        wb,
        window_strides=(1, 1),
        padding=((1, 1), (1, 1)),
        dimension_numbers=("NCHW", "OIHW", "NCHW"),
        precision=lax.Precision.HIGHEST,
    )
    return out + bb.reshape(1, -1, 1, 1)


if __name__ == "__main__":
    # Stable-diffusion conv_in shapes at a small latent resolution.
    B, Cin, H, W = 2, 4, 16, 16
    Cout, KH, KW = 320, 3, 3

    key = jax.random.PRNGKey(0)
    kx, kw, kb = jax.random.split(key, 3)

    x = jax.random.normal(kx, (B, Cin, H, W), dtype=jnp.float32)

    # Deterministic param init mimicking PyTorch Conv2d default (U[-1/sqrt(fan_in), +]).
    fan_in = Cin * KH * KW
    bound = 1.0 / (fan_in ** 0.5)
    weight = jax.random.uniform(kw, (Cout, Cin, KH, KW), jnp.float32, -bound, bound)
    bias = jax.random.uniform(kb, (Cout,), jnp.float32, -bound, bound)

    ref = conv_in_reference(x, weight, bias)

    # 1) Default tile (single H*W tile per batch element at this small size).
    out = jax.block_until_ready(jax.jit(conv_in_pallas)(x, weight, bias))
    assert out.shape == (B, Cout, H, W), out.shape
    err = float(jnp.max(jnp.abs(out - ref)))
    assert jnp.allclose(out, ref, atol=1e-3, rtol=1e-3), err

    # 2) Small tile to exercise the multi-step grid / index_map / padding path.
    out2 = jax.block_until_ready(
        jax.jit(lambda a, b, c: conv_in_pallas(a, b, c, tn=128))(x, weight, bias)
    )
    err2 = float(jnp.max(jnp.abs(out2 - ref)))
    assert jnp.allclose(out2, ref, atol=1e-3, rtol=1e-3), err2

    print("KERNEL_OK")
</pallas_src>

<mosaic_0001>
module attributes {stable_mosaic.version = 11 : i64} {
  func.func @_conv_in_kernel(%arg0: i32, %arg1: i32, %arg2: memref<320x40xbf16, #tpu.memory_space<vmem>>, %arg3: memref<1x40x256xbf16, #tpu.memory_space<vmem>>, %arg4: memref<1x320x256xf32, #tpu.memory_space<vmem>>) attributes {dimension_semantics = [#tpu.dimension_semantics<parallel>, #tpu.dimension_semantics<parallel>], iteration_bounds = array<i64: 2, 1>, scalar_prefetch = 0 : i64, scratch_operands = 0 : i64, tpu.core_type = #tpu.core_type<tc>, window_params = [{pipeline_mode = #tpu.pipeline_mode<synchronous>, transform_indices = @transform_0, window_bounds = array<i64: 320, 40>}, {transform_indices = @transform_1, window_bounds = array<i64: 1, 40, 256>}, {transform_indices = @transform_2, window_bounds = array<i64: 1, 320, 256>}]} {
    %c0 = arith.constant 0 : index
    %c0_0 = arith.constant 0 : index
    %0 = vector.load %arg2[%c0, %c0_0] : memref<320x40xbf16, #tpu.memory_space<vmem>>, vector<320x40xbf16>
    %c0_1 = arith.constant 0 : index
    %c0_2 = arith.constant 0 : index
    %c0_3 = arith.constant 0 : index
    %1 = vector.load %arg3[%c0_1, %c0_2, %c0_3] : memref<1x40x256xbf16, #tpu.memory_space<vmem>>, vector<1x40x256xbf16>
    %2 = vector.shape_cast %1 : vector<1x40x256xbf16> to vector<40x256xbf16>
    %cst = arith.constant dense<0.000000e+00> : vector<320x256xf32>
    %3 = tpu.matmul %0, %2, %cst {dimension_numbers = #tpu.dot_dimension_numbers<[1], [0], [0], [1], [0, 0, 1, 1], [], []>} : vector<320x40xbf16>, vector<40x256xbf16>, vector<320x256xf32> -> vector<320x256xf32>
    %c0_4 = arith.constant 0 : index
    %c0_5 = arith.constant 0 : index
    %c0_6 = arith.constant 0 : index
    %4 = vector.load %arg4[%c0_4, %c0_5, %c0_6] : memref<1x320x256xf32, #tpu.memory_space<vmem>>, vector<1x320x256xf32>
    %5 = vector.shape_cast %4 : vector<1x320x256xf32> to vector<320x256xf32>
    %6 = vector.shape_cast %3 : vector<320x256xf32> to vector<1x320x256xf32>
    tpu.vector_store %arg4[%c0_4, %c0_5, %c0_6], %6 {strides = array<i32>} : memref<1x320x256xf32, #tpu.memory_space<vmem>>, vector<1x320x256xf32>,
    return
  }
  func.func @transform_0(%arg0: i32, %arg1: i32) -> (i32, i32) {
    %c0_i32 = arith.constant 0 : i32
    %c0_i32_0 = arith.constant 0 : i32
    %c0_i32_1 = arith.constant 0 : i32
    return %c0_i32, %c0_i32_0 : i32, i32
  }
  func.func @transform_1(%arg0: i32, %arg1: i32) -> (i32, i32, i32) {
    %c0_i32 = arith.constant 0 : i32
    %c0_i32_0 = arith.constant 0 : i32
    return %arg0, %c0_i32, %arg1 : i32, i32, i32
  }
  func.func @transform_2(%arg0: i32, %arg1: i32) -> (i32, i32, i32) {
    %c0_i32 = arith.constant 0 : i32
    %c0_i32_0 = arith.constant 0 : i32
    return %arg0, %c0_i32, %arg1 : i32, i32, i32
  }
}

</mosaic_0001>

<llo_original>
// kernel: conv_in_pallas.1
$region0: #{conv_in_pallas.1}
  #allocation0 [shape = 'u32[]', space=smem, size = 0x4, offset = 0x4, fixed_abs, tag = 'smem constant byte address 0x4 - core index']
  #allocation1 [shape = 'u32[144,128]{1,0:T(1,128)}', space=vmem, size = 0x12000, scoped, tag = 'internal scratch']
  %s0 = inlined_call_operand.vmem [shape: bf16[320,40], index: 0, kind: input, shape index: {}]
  %s1 = inlined_call_operand.vmem [shape: bf16[2,40,256], index: 1, kind: input, shape index: {}]
  %s2 = inlined_call_operand.vmem [shape: f32[2,320,256], index: 2, kind: output, shape index: {}]
  %s3 = sld [smem:[#allocation0]]
  $region41: #{conv_in_pallas.1} parent=0
    _
  %s5 = ssub.s32 1, %s3
  %s6 = scalar_select 0, %s5, %s3
  loop: start=0, step=1, limit=4
  $region2: #{conv_in_pallas.1} parent=0 // loop_pre_header
    _
  $region3: #{conv_in_pallas.1} parent=0 // loop_header
    %s8 = sphi 0, %s12
    %p9 = scmp.ge.s32.totalorder %s8, 4
    %s15 = sphi 0, %s27
    %s16 = sphi 0, %s23
    %s17 = sphi 0, %s15
    %s18 = sphi 0, %s16
    %s19 = sphi 0, %s17
    %s20 = sphi 0, %s18
    %s28 = sphi 0, %s28
    %s30 = sphi 0, %s28
    %s31 = sphi 0, %s30
    %s45 = sphi 0, %s31
    %s53 = sphi 0, %s55
    %s56 = sphi 0, %s53
    %s57 = sphi 0, %s56
    %s73 = sphi 0, %s57
    %s81 = sphi 0, %s83
    %s84 = sphi 0, %s81
    %s85 = sphi 0, %s84
    %s101 = sphi 0, %s85
  $region4: #{conv_in_pallas.1} parent=0 // loop_header_branch
    %11 = sbr.rel (%p9) target = $region8
  $region5: #{conv_in_pallas.1} parent=0 // loop_body
    %s13 = ssub.s32 %s8, 1
    %s14 = ssub.s32 %s8, 2
    %s21 = sadd.s32 1, %s16
    %p22 = scmp.ge.s32.totalorder %s21, 1
    %s23 = scalar_select %p22, 0, %s21
    %s24 = sadd.s32 1, %s15
    %s25 = scalar_select %p22, %s24, %s15
    %p26 = scmp.ge.s32.totalorder %s25, 2
    %s27 = scalar_select %p26, 0, %s25
    %s29 = sadd.s32 %s28, 1
    %p32 = scmp.eq.s32.totalorder %s8, 1
    %p33 = scmp.ne.s32.totalorder %s28, %s30
    %p34 = scmp.eq.s32.totalorder %s8, 0
    %p35 = por %p33, %p34
    %p36 = scmp.ne.s32.totalorder %s28, %s30
    %p37 = scmp.eq.s32.totalorder %s13, 1
    %p38 = por %p36, %p37
    %p39 = scmp.ne.s32.totalorder %s30, %s31
    %p40 = scmp.eq.s32.totalorder %s13, 0
    %p41 = por %p39, %p40
    %p42 = scmp.ne.s32.totalorder %s30, %s31
    %p43 = scmp.eq.s32.totalorder %s14, 1
    %p44 = por %p42, %p43
    %p46 = scmp.ne.s32.totalorder %s31, %s45
    %p47 = scmp.eq.s32.totalorder %s14, 0
    %p48 = por %p46, %p47
    %s49 = ssub.s32 %s15, %s27
    %s50 = ssub.s32 %s16, %s23
    %s51 = sor.u32 %s49, %s50
    %p52 = scmp.eq.s32.totalorder %s51, 0
    %s54 = sadd.s32 %s53, 1
    %s55 = scalar_select %p52, %s53, %s54
    %p58 = pneg %p52
    %p59 = scmp.eq.s32.totalorder %s8, 1
    %p60 = por %p58, %p59
    %p61 = scmp.ne.s32.totalorder %s53, %s56
    %p62 = scmp.eq.s32.totalorder %s8, 0
    %p63 = por %p61, %p62
    %p64 = scmp.ne.s32.totalorder %s53, %s56
    %p65 = scmp.eq.s32.totalorder %s13, 1
    %p66 = por %p64, %p65
    %p67 = scmp.ne.s32.totalorder %s56, %s57
    %p68 = scmp.eq.s32.totalorder %s13, 0
    %p69 = por %p67, %p68
    %p70 = scmp.ne.s32.totalorder %s56, %s57
    %p71 = scmp.eq.s32.totalorder %s14, 1
    %p72 = por %p70, %p71
    %p74 = scmp.ne.s32.totalorder %s57, %s73
    %p75 = scmp.eq.s32.totalorder %s14, 0
    %p76 = por %p74, %p75
    %s77 = ssub.s32 %s15, %s27
    %s78 = ssub.s32 %s16, %s23
    %s79 = sor.u32 %s77, %s78
    %p80 = scmp.eq.s32.totalorder %s79, 0
    %s82 = sadd.s32 %s81, 1
    %s83 = scalar_select %p80, %s81, %s82
    %p86 = pneg %p80
    %p87 = scmp.eq.s32.totalorder %s8, 1
    %p88 = por %p86, %p87
    %p89 = scmp.ne.s32.totalorder %s81, %s84
    %p90 = scmp.eq.s32.totalorder %s8, 0
    %p91 = por %p89, %p90
    %p92 = scmp.ne.s32.totalorder %s81, %s84
    %p93 = scmp.eq.s32.totalorder %s13, 1
    %p94 = por %p92, %p93
    %p95 = scmp.ne.s32.totalorder %s84, %s85
    %p96 = scmp.eq.s32.totalorder %s13, 0
    %p97 = por %p95, %p96
    %p98 = scmp.ne.s32.totalorder %s84, %s85
    %p99 = scmp.eq.s32.totalorder %s14, 1
    %p100 = por %p98, %p99
    %p102 = scmp.ne.s32.totalorder %s85, %s101
    %p103 = scmp.eq.s32.totalorder %s14, 0
    %p104 = por %p102, %p103
    %p105 = scmp.le.s32.totalorder 1, %s8
    %p106 = scmp.lt.s32.totalorder %s8, 3
    %p107 = pnand %p105, %p106
    %p108 = pneg %p107
    // Predicated region
    $region9: #{conv_in_pallas.1} parent=5 // pred_check
      _
    $region10: #{conv_in_pallas.1} parent=5 // pred_check_branch
      %110 = sbr.rel (%p107) target = $region12
    $region11: #{conv_in_pallas.1} parent=5 // pred_region
      %s111 = ssub.s32 %s8, 1
      // Predicated region
      $region13: #{conv_in_pallas.1} parent=11 // pred_check
        %p112 = pneg %p41
      $region14: #{conv_in_pallas.1} parent=11 // pred_check_branch
        %114 = sbr.rel (%p112) target = $region16
      $region15: #{conv_in_pallas.1} parent=11 // pred_region
        _
      $region16: #{conv_in_pallas.1} parent=11 // pred_fallthru
        _
    $region12: #{conv_in_pallas.1} parent=5 // pred_fallthru
      _
    %p115 = scmp.lt.s32.totalorder %s8, 2
    // Predicated region
    $region17: #{conv_in_pallas.1} parent=5 // pred_check
      %p116 = pneg %p115
    $region18: #{conv_in_pallas.1} parent=5 // pred_check_branch
      %118 = sbr.rel (%p116) target = $region20
    $region19: #{conv_in_pallas.1} parent=5 // pred_region
      // Predicated region
      $region21: #{conv_in_pallas.1} parent=19 // pred_check
        %p119 = pneg %p63
      $region22: #{conv_in_pallas.1} parent=19 // pred_check_branch
        %121 = sbr.rel (%p119) target = $region24
      $region23: #{conv_in_pallas.1} parent=19 // pred_region
        %s122 = smul.u32 2, %s16
        %p123 = scmp.lt.s32.totalorder %s15, 1
        %s124 = scalar_select %p123, %s15, 1
        %p125 = scmp.lt.s32.totalorder %s122, 1
        %s126 = scalar_select %p125, %s122, 1
        %s127 = smul.addr %s124, 10
        %s128 = sadd.s32 %s126, %s127
        %s129 = smul.addr %s128, 4
        %s130 = scalar_lea.vmem %s1, %s129
        %s131 = smul.u32 2, %s16
      $region24: #{conv_in_pallas.1} parent=19 // pred_fallthru
        _
    $region20: #{conv_in_pallas.1} parent=5 // pred_fallthru
      _
    %p132 = scmp.le.s32.totalorder 1, %s8
    %p133 = scmp.lt.s32.totalorder %s8, 3
    %p134 = pnand %p132, %p133
    %p135 = pneg %p134
    // Predicated region
    $region25: #{conv_in_pallas.1} parent=5 // pred_check
      _
    $region26: #{conv_in_pallas.1} parent=5 // pred_check_branch
      %137 = sbr.rel (%p134) target = $region28
    $region27: #{conv_in_pallas.1} parent=5 // pred_region
      %s138 = ssub.s32 %s8, 1
      %p139 = pneg %p41
      %p140 = pneg %p38
      %s141 = smul.u32 2, %s18
      %p142 = scmp.lt.s32.totalorder %s17, 1
      %s143 = scalar_select %p142, %s17, 1
      %p144 = scmp.lt.s32.totalorder %s141, 1
      %s145 = scalar_select %p144, %s141, 1
      %s146 = smul.addr %s143, 10
      %s147 = sadd.s32 %s145, %s146
      %s148 = smul.addr %s147, 4
      %s149 = scalar_lea.vmem %s1, %s148
      %p150 = pneg %p69
      %p151 = pneg %p66
      %p152 = pneg %p97
      %p153 = pneg %p94
      %s154 = smul.u32 2, %s18
      %p155 = scmp.lt.s32.totalorder %s17, 1
      %s156 = scalar_select %p155, %s17, 1
      %p157 = scmp.lt.s32.totalorder %s154, 1
      %s158 = scalar_select %p157, %s154, 1
      %s159 = smul.addr %s156, 80
      %s160 = sadd.s32 %s158, %s159
      %s161 = smul.addr %s160, 8
      %s162 = scalar_lea.vmem %s2, %s161
      %s163 = smul.u32 2, %s18
      %p164 = scmp.lt.s32.totalorder %s17, 1
      %s165 = scalar_select %p164, %s17, 1
      %p166 = scmp.lt.s32.totalorder %s163, 1
      %s167 = scalar_select %p166, %s163, 1
      %s168 = smul.addr %s165, 10
      %s169 = sadd.s32 %s167, %s168
      %s170 = smul.addr %s169, 4
      %s171 = scalar_lea.vmem %s1, %s170
      %s172 = smul.u32 2, %s18
      %s173 = smul.u32 2, %s18
      %p174 = scmp.lt.s32.totalorder %s17, 1
      %s175 = scalar_select %p174, %s17, 1
      %p176 = scmp.lt.s32.totalorder %s173, 1
      %s177 = scalar_select %p176, %s173, 1
      %s178 = smul.addr %s175, 80
      %s179 = sadd.s32 %s177, %s178
      %s180 = smul.addr %s179, 8
      %s181 = scalar_lea.vmem %s2, %s180
      %s182 = smul.u32 2, %s18
      %v184 = vld [vmem:[%s0] sm:$0xf]
      %v185 = vld [vmem:[%s0 + $0x4] sm:$0xf]
      %v186 = vld [vmem:[%s0 + $0x8] sm:$0xf]
      %v187 = vld [vmem:[%s0 + $0xc] sm:$0xf]
      %v188 = vld [vmem:[%s0 + $0x10] sm:$0xf]
      %v189 = vld [vmem:[%s0 + $0x14] sm:$0xf]
      %v190 = vld [vmem:[%s0 + $0x18] sm:$0xf]
      %v191 = vld [vmem:[%s0 + $0x1c] sm:$0xf]
      %v192 = vld [vmem:[%s0 + $0x20] sm:$0xf]
      %v193 = vld [vmem:[%s0 + $0x24] sm:$0xf]
      %v194 = vld [vmem:[%s0 + $0x28] sm:$0xf]
      %v195 = vld [vmem:[%s0 + $0x2c] sm:$0xf]
      %v196 = vld [vmem:[%s0 + $0x30] sm:$0xf]
      %v197 = vld [vmem:[%s0 + $0x34] sm:$0xf]
      %v198 = vld [vmem:[%s0 + $0x38] sm:$0xf]
      %v199 = vld [vmem:[%s0 + $0x3c] sm:$0xf]
      %v200 = vld [vmem:[%s0 + $0x40] sm:$0xf]
      %v201 = vld [vmem:[%s0 + $0x44] sm:$0xf]
      %v202 = vld [vmem:[%s0 + $0x48] sm:$0xf]
      %v203 = vld [vmem:[%s0 + $0x4c] sm:$0xf]
      %v204 = vld [vmem:[%s0 + $0x50] sm:$0xf]
      %v205 = vld [vmem:[%s0 + $0x54] sm:$0xf]
      %v206 = vld [vmem:[%s0 + $0x58] sm:$0xf]
      %v207 = vld [vmem:[%s0 + $0x5c] sm:$0xf]
      %v208 = vld [vmem:[%s0 + $0x60] sm:$0xf]
      %v209 = vld [vmem:[%s0 + $0x64] sm:$0xf]
      %v210 = vld [vmem:[%s0 + $0x68] sm:$0xf]
      %v211 = vld [vmem:[%s0 + $0x6c] sm:$0xf]
      %v212 = vld [vmem:[%s0 + $0x70] sm:$0xf]
      %v213 = vld [vmem:[%s0 + $0x74] sm:$0xf]
      %v214 = vld [vmem:[%s0 + $0x78] sm:$0xf]
      %v215 = vld [vmem:[%s0 + $0x7c] sm:$0xf]
      %v216 = vld [vmem:[%s0 + $0x80] sm:$0xf]
      %v217 = vld [vmem:[%s0 + $0x84] sm:$0xf]
      %v218 = vld [vmem:[%s0 + $0x88] sm:$0xf]
      %v219 = vld [vmem:[%s0 + $0x8c] sm:$0xf]
      %v220 = vld [vmem:[%s0 + $0x90] sm:$0xf]
      %v221 = vld [vmem:[%s0 + $0x94] sm:$0xf]
      %v222 = vld [vmem:[%s0 + $0x98] sm:$0xf]
      %v223 = vld [vmem:[%s0 + $0x9c] sm:$0xf]
      %v224 = vld [vmem:[%s171] sm:$0xff]
      %v225 = vld [vmem:[%s171 + $0x8] sm:$0xff]
      %v226 = vld [vmem:[%s171 + $0x10] sm:$0xff]
      %v227 = vld [vmem:[%s171 + $0x18] sm:$0xff]
      %v228 = vld [vmem:[%s171 + $0x20] sm:$0xff]
      %v269 = vunpack.c.l.b16 %v184
      %v270 = vunpack.c.l.b16 %v185
      %v271 = vunpack.c.l.b16 %v186
      %v272 = vunpack.c.l.b16 %v187
      %v273 = vunpack.c.l.b16 %v188
      %v274 = vunpack.c.l.b16 %v189
      %v275 = vunpack.c.l.b16 %v190
      %v276 = vunpack.c.l.b16 %v191
      %v277 = vunpack.c.l.b16 %v192
      %v278 = vunpack.c.l.b16 %v193
      %v279 = vunpack.c.l.b16 %v194
      %v280 = vunpack.c.l.b16 %v195
      %v281 = vunpack.c.l.b16 %v196
      %v282 = vunpack.c.l.b16 %v197
      %v283 = vunpack.c.l.b16 %v198
      %v284 = vunpack.c.l.b16 %v199
      %v285 = vunpack.c.l.b16 %v200
      %v286 = vunpack.c.l.b16 %v201
      %v287 = vunpack.c.l.b16 %v202
      %v288 = vunpack.c.l.b16 %v203
      %v289 = vunpack.c.l.b16 %v204
      %v290 = vunpack.c.l.b16 %v205
      %v291 = vunpack.c.l.b16 %v206
      %v292 = vunpack.c.l.b16 %v207
      %v293 = vunpack.c.l.b16 %v208
      %v294 = vunpack.c.l.b16 %v209
      %v295 = vunpack.c.l.b16 %v210
      %v296 = vunpack.c.l.b16 %v211
      %v297 = vunpack.c.l.b16 %v212
      %v298 = vunpack.c.l.b16 %v213
      %v299 = vunpack.c.l.b16 %v214
      %v300 = vunpack.c.l.b16 %v215
      %v301 = vunpack.c.l.b16 %v216
      %v302 = vunpack.c.l.b16 %v217
      %v303 = vunpack.c.l.b16 %v218
      %v304 = vunpack.c.l.b16 %v219
      %v305 = vunpack.c.l.b16 %v220
      %v306 = vunpack.c.l.b16 %v221
      %v307 = vunpack.c.l.b16 %v222
      %v308 = vunpack.c.l.b16 %v223
      %v309 = vpack.c.b16 %v270, %v269
      %v310 = vpack.c.b16 %v272, %v271
      %v311 = vpack.c.b16 %v274, %v273
      %v312 = vpack.c.b16 %v276, %v275
      %v313 = vpack.c.b16 %v278, %v277
      %v314 = vpack.c.b16 %v280, %v279
      %v315 = vpack.c.b16 %v282, %v281
      %v316 = vpack.c.b16 %v284, %v283
      %v317 = vpack.c.b16 %v286, %v285
      %v318 = vpack.c.b16 %v288, %v287
      %v319 = vpack.c.b16 %v290, %v289
      %v320 = vpack.c.b16 %v292, %v291
      %v321 = vpack.c.b16 %v294, %v293
      %v322 = vpack.c.b16 %v296, %v295
      %v323 = vpack.c.b16 %v298, %v297
      %v324 = vpack.c.b16 %v300, %v299
      %v325 = vpack.c.b16 %v302, %v301
      %v326 = vpack.c.b16 %v304, %v303
      %v327 = vpack.c.b16 %v306, %v305
      %v328 = vpack.c.b16 %v308, %v307
      %v334 = vunpack.c.l.b16 %v224
      %v335 = vunpack.c.h.b16 %v224
      %v336 = vunpack.c.l.b16 %v225
      %v337 = vunpack.c.h.b16 %v225
      %v338 = vunpack.c.l.b16 %v226
      %v339 = vunpack.c.h.b16 %v226
      %v340 = vunpack.c.l.b16 %v227
      %v341 = vunpack.c.h.b16 %v227
      %v342 = vunpack.c.l.b16 %v228
      %v343 = vunpack.c.h.b16 %v228
      %v344 = vpack.c.b16 %v336, %v334
      %v345 = vpack.c.b16 %v337, %v335
      %v346 = vpack.c.b16 %v340, %v338
      %v347 = vpack.c.b16 %v341, %v339
      %v348 = vpack.c.b16 %v342, %v342
      %v349 = vpack.c.b16 %v343, %v343
      %vm354 = vcmask 326656
      %v356 = vsel %vm354, %v309, 0
      %v359 = vsel %vm354, %v310, 0
      %v362 = vsel %vm354, %v311, 0
      %v365 = vsel %vm354, %v312, 0
      %v368 = vsel %vm354, %v313, 0
      %v371 = vsel %vm354, %v314, 0
      %v374 = vsel %vm354, %v315, 0
      %v377 = vsel %vm354, %v316, 0
      %v380 = vsel %vm354, %v317, 0
      %v383 = vsel %vm354, %v318, 0
      %v386 = vsel %vm354, %v319, 0
      %v389 = vsel %vm354, %v320, 0
      %v392 = vsel %vm354, %v321, 0
      %v395 = vsel %vm354, %v322, 0
      %v398 = vsel %vm354, %v323, 0
      %v401 = vsel %vm354, %v324, 0
      %v404 = vsel %vm354, %v325, 0
      %v407 = vsel %vm354, %v326, 0
      %v410 = vsel %vm354, %v327, 0
      %v413 = vsel %vm354, %v328, 0
      %vm415 = vcmask 1043456
      %v417 = vsel %vm415, %v348, 0
      %v420 = vsel %vm415, %v349, 0
      %422 = vmatprep.subr.bf16.mxu0 0
      %423 = vmatpush1.bf16.msra.mxu0 0
      %424 = vmatprep.subr.bf16.mxu0 0
      %425 = vmatpush1.bf16.msra.mxu0 0
      %426 = vmatprep.subr.bf16.mxu0 0
      %427 = vmatpush1.bf16.msra.mxu0 0
      %428 = vmatprep.subr.bf16.mxu0 0
      %429 = vmatpush1.bf16.msra.mxu0 0
      %430 = vmatprep.subr.bf16.mxu0 0
      %431 = vmatpush1.bf16.msra.mxu0 0
      %432 = vmatprep.subr.bf16.mxu0 %v420
      %433 = vmatpush1.bf16.msra.mxu0 %v417
      %434 = vmatprep.subr.bf16.mxu0 %v347
      %435 = vmatpush1.bf16.msra.mxu0 %v346
      %436 = vmatprep.subr.bf16.mxu0 %v345
      %437 = vmatpush1.bf16.msra.mxu0 %v344
      %438 = vmatprep.subr.bf16.mxu0 0
      %439 = vmatpush2.bf16.msra.mxu0 0
      %440 = vmatprep.subr.bf16.mxu0 0
      %441 = vmatpush2.bf16.msra.mxu0 0
      %442 = vmatprep.subr.bf16.mxu0 0
      %443 = vmatpush2.bf16.msra.mxu0 0
      %444 = vmatprep.subr.bf16.mxu0 0
      %445 = vmatpush2.bf16.msra.mxu0 0
      %446 = vmatprep.subr.bf16.mxu0 0
      %447 = vmatpush2.bf16.msra.mxu0 0
      %448 = vmatprep.subr.bf16.mxu0 0
      %449 = vmatpush2.bf16.msra.mxu0 0
      %450 = vmatprep.subr.bf16.mxu0 0
      %451 = vmatpush2.bf16.msra.mxu0 0
      %452 = vmatprep.subr.bf16.mxu0 0
      %453 = vmatpush2.bf16.msra.mxu0 0
      %454 = vmatprep.mubr.bf16.mxu0 0
      %455 = vmatmul.mubr.bf16.gmra.mxu0 %v356
      %v456 = vpop.f32.mrf.mxu0
      %v457 = vadd.f32 0.0, %v456
      %v458 = vpop.f32.mrf.mxu0
      %v459 = vadd.f32 0.0, %v458
      %v460 = vpop.f32.mrf.mxu0
      %v461 = vadd.f32 0.0, %v460
      %v462 = vpop.f32.mrf.mxu0
      %v463 = vadd.f32 0.0, %v462
      %464 = vmatprep.mubr.bf16.mxu0 0
      %465 = vmatmul.mubr.bf16.gmra.mxu0 %v359
      %v466 = vpop.f32.mrf.mxu0
      %v467 = vadd.f32 0.0, %v466
      %v468 = vpop.f32.mrf.mxu0
      %v469 = vadd.f32 0.0, %v468
      %v470 = vpop.f32.mrf.mxu0
      %v471 = vadd.f32 0.0, %v470
      %v472 = vpop.f32.mrf.mxu0
      %v473 = vadd.f32 0.0, %v472
      %474 = vmatprep.mubr.bf16.mxu0 0
      %475 = vmatmul.mubr.bf16.gmra.mxu0 %v362
      %v476 = vpop.f32.mrf.mxu0
      %v477 = vadd.f32 0.0, %v476
      %v478 = vpop.f32.mrf.mxu0
      %v479 = vadd.f32 0.0, %v478
      %v480 = vpop.f32.mrf.mxu0
      %v481 = vadd.f32 0.0, %v480
      %v482 = vpop.f32.mrf.mxu0
      %v483 = vadd.f32 0.0, %v482
      %484 = vmatprep.mubr.bf16.mxu0 0
      %485 = vmatmul.mubr.bf16.gmra.mxu0 %v365
      %v486 = vpop.f32.mrf.mxu0
      %v487 = vadd.f32 0.0, %v486
      %v488 = vpop.f32.mrf.mxu0
      %v489 = vadd.f32 0.0, %v488
      %v490 = vpop.f32.mrf.mxu0
      %v491 = vadd.f32 0.0, %v490
      %v492 = vpop.f32.mrf.mxu0
      %v493 = vadd.f32 0.0, %v492
      %494 = vmatprep.mubr.bf16.mxu0 0
      %495 = vmatmul.mubr.bf16.gmra.mxu0 %v368
      %v496 = vpop.f32.mrf.mxu0
      %v497 = vadd.f32 0.0, %v496
      %v498 = vpop.f32.mrf.mxu0
      %v499 = vadd.f32 0.0, %v498
      %v500 = vpop.f32.mrf.mxu0
      %v501 = vadd.f32 0.0, %v500
      %v502 = vpop.f32.mrf.mxu0
      %v503 = vadd.f32 0.0, %v502
      %504 = vmatprep.mubr.bf16.mxu0 0
      %505 = vmatmul.mubr.bf16.gmra.mxu0 %v371
      %v506 = vpop.f32.mrf.mxu0
      %v507 = vadd.f32 0.0, %v506
      %v508 = vpop.f32.mrf.mxu0
      %v509 = vadd.f32 0.0, %v508
      %v510 = vpop.f32.mrf.mxu0
      %v511 = vadd.f32 0.0, %v510
      %v512 = vpop.f32.mrf.mxu0
      %v513 = vadd.f32 0.0, %v512
      %514 = vmatprep.mubr.bf16.mxu0 0
      %515 = vmatmul.mubr.bf16.gmra.mxu0 %v374
      %v516 = vpop.f32.mrf.mxu0
      %v517 = vadd.f32 0.0, %v516
      %v518 = vpop.f32.mrf.mxu0
      %v519 = vadd.f32 0.0, %v518
      %v520 = vpop.f32.mrf.mxu0
      %v521 = vadd.f32 0.0, %v520
      %v522 = vpop.f32.mrf.mxu0
      %v523 = vadd.f32 0.0, %v522
      %524 = vmatprep.mubr.bf16.mxu0 0
      %525 = vmatmul.mubr.bf16.gmra.mxu0 %v377
      %v526 = vpop.f32.mrf.mxu0
      %v527 = vadd.f32 0.0, %v526
      %v528 = vpop.f32.mrf.mxu0
      %v529 = vadd.f32 0.0, %v528
      %v530 = vpop.f32.mrf.mxu0
      %v531 = vadd.f32 0.0, %v530
      %v532 = vpop.f32.mrf.mxu0
      %v533 = vadd.f32 0.0, %v532
      %534 = vmatprep.mubr.bf16.mxu0 0
      %535 = vmatmul.mubr.bf16.gmra.mxu0 %v380
      %v536 = vpop.f32.mrf.mxu0
      %v537 = vadd.f32 0.0, %v536
      %v538 = vpop.f32.mrf.mxu0
      %v539 = vadd.f32 0.0, %v538
      %v540 = vpop.f32.mrf.mxu0
      %v541 = vadd.f32 0.0, %v540
      %v542 = vpop.f32.mrf.mxu0
      %v543 = vadd.f32 0.0, %v542
      %544 = vmatprep.mubr.bf16.mxu0 0
      %545 = vmatmul.mubr.bf16.gmra.mxu0 %v383
      %v546 = vpop.f32.mrf.mxu0
      %v547 = vadd.f32 0.0, %v546
      %v548 = vpop.f32.mrf.mxu0
      %v549 = vadd.f32 0.0, %v548
      %v550 = vpop.f32.mrf.mxu0
      %v551 = vadd.f32 0.0, %v550
      %v552 = vpop.f32.mrf.mxu0
      %v553 = vadd.f32 0.0, %v552
      %554 = vmatprep.mubr.bf16.mxu0 0
      %555 = vmatmul.mubr.bf16.gmra.mxu0 %v386
      %v556 = vpop.f32.mrf.mxu0
      %v557 = vadd.f32 0.0, %v556
      %v558 = vpop.f32.mrf.mxu0
      %v559 = vadd.f32 0.0, %v558
      %v560 = vpop.f32.mrf.mxu0
      %v561 = vadd.f32 0.0, %v560
      %v562 = vpop.f32.mrf.mxu0
      %v563 = vadd.f32 0.0, %v562
      %564 = vmatprep.mubr.bf16.mxu0 0
      %565 = vmatmul.mubr.bf16.gmra.mxu0 %v389
      %v566 = vpop.f32.mrf.mxu0
      %v567 = vadd.f32 0.0, %v566
      %v568 = vpop.f32.mrf.mxu0
      %v569 = vadd.f32 0.0, %v568
      %v570 = vpop.f32.mrf.mxu0
      %v571 = vadd.f32 0.0, %v570
      %v572 = vpop.f32.mrf.mxu0
      %v573 = vadd.f32 0.0, %v572
      %574 = vmatprep.mubr.bf16.mxu0 0
      %575 = vmatmul.mubr.bf16.gmra.mxu0 %v392
      %v576 = vpop.f32.mrf.mxu0
      %v577 = vadd.f32 0.0, %v576
      %v578 = vpop.f32.mrf.mxu0
      %v579 = vadd.f32 0.0, %v578
      %v580 = vpop.f32.mrf.mxu0
      %v581 = vadd.f32 0.0, %v580
      %v582 = vpop.f32.mrf.mxu0
      %v583 = vadd.f32 0.0, %v582
      %584 = vmatprep.mubr.bf16.mxu0 0
      %585 = vmatmul.mubr.bf16.gmra.mxu0 %v395
      %v586 = vpop.f32.mrf.mxu0
      %v587 = vadd.f32 0.0, %v586
      %v588 = vpop.f32.mrf.mxu0
      %v589 = vadd.f32 0.0, %v588
      %v590 = vpop.f32.mrf.mxu0
      %v591 = vadd.f32 0.0, %v590
      %v592 = vpop.f32.mrf.mxu0
      %v593 = vadd.f32 0.0, %v592
      %594 = vmatprep.mubr.bf16.mxu0 0
      %595 = vmatmul.mubr.bf16.gmra.mxu0 %v398
      %v596 = vpop.f32.mrf.mxu0
      %v597 = vadd.f32 0.0, %v596
      %v598 = vpop.f32.mrf.mxu0
      %v599 = vadd.f32 0.0, %v598
      %v600 = vpop.f32.mrf.mxu0
      %v601 = vadd.f32 0.0, %v600
      %v602 = vpop.f32.mrf.mxu0
      %v603 = vadd.f32 0.0, %v602
      %604 = vmatprep.mubr.bf16.mxu0 0
      %605 = vmatmul.mubr.bf16.gmra.mxu0 %v401
      %v606 = vpop.f32.mrf.mxu0
      %v607 = vadd.f32 0.0, %v606
      %v608 = vpop.f32.mrf.mxu0
      %v609 = vadd.f32 0.0, %v608
      %v610 = vpop.f32.mrf.mxu0
      %v611 = vadd.f32 0.0, %v610
      %v612 = vpop.f32.mrf.mxu0
      %v613 = vadd.f32 0.0, %v612
      %614 = vmatprep.mubr.bf16.mxu0 0
      %615 = vmatmul.mubr.bf16.gmra.mxu0 %v404
      %v616 = vpop.f32.mrf.mxu0
      %v617 = vadd.f32 0.0, %v616
      %v618 = vpop.f32.mrf.mxu0
      %v619 = vadd.f32 0.0, %v618
      %v620 = vpop.f32.mrf.mxu0
      %v621 = vadd.f32 0.0, %v620
      %v622 = vpop.f32.mrf.mxu0
      %v623 = vadd.f32 0.0, %v622
      %624 = vmatprep.mubr.bf16.mxu0 0
      %625 = vmatmul.mubr.bf16.gmra.mxu0 %v407
      %v626 = vpop.f32.mrf.mxu0
      %v627 = vadd.f32 0.0, %v626
      %v628 = vpop.f32.mrf.mxu0
      %v629 = vadd.f32 0.0, %v628
      %v630 = vpop.f32.mrf.mxu0
      %v631 = vadd.f32 0.0, %v630
      %v632 = vpop.f32.mrf.mxu0
      %v633 = vadd.f32 0.0, %v632
      %634 = vmatprep.mubr.bf16.mxu0 0
      %635 = vmatmul.mubr.bf16.gmra.mxu0 %v410
      %v636 = vpop.f32.mrf.mxu0
      %v637 = vadd.f32 0.0, %v636
      %v638 = vpop.f32.mrf.mxu0
      %v639 = vadd.f32 0.0, %v638
      %v640 = vpop.f32.mrf.mxu0
      %v641 = vadd.f32 0.0, %v640
      %v642 = vpop.f32.mrf.mxu0
      %v643 = vadd.f32 0.0, %v642
      %644 = vmatprep.mubr.bf16.mxu0 0
      %645 = vmatmul.mubr.bf16.gmra.mxu0 %v413
      %v646 = vpop.f32.mrf.mxu0
      %v647 = vadd.f32 0.0, %v646
      %v648 = vpop.f32.mrf.mxu0
      %v649 = vadd.f32 0.0, %v648
      %v650 = vpop.f32.mrf.mxu0
      %v651 = vadd.f32 0.0, %v650
      %v652 = vpop.f32.mrf.mxu0
      %v653 = vadd.f32 0.0, %v652
      %654 = vdwg.mxu0
      %655 = vst [vmem:[%s181] sm:$0xff] %v457
      %656 = vst [vmem:[%s181 + $0x8] sm:$0xff] %v459
      %657 = vst [vmem:[%s181 + $0x10] sm:$0xff] %v461
      %658 = vst [vmem:[%s181 + $0x18] sm:$0xff] %v463
      %659 = vst [vmem:[%s181 + $0x20] sm:$0xff] %v467
      %660 = vst [vmem:[%s181 + $0x28] sm:$0xff] %v469
      %661 = vst [vmem:[%s181 + $0x30] sm:$0xff] %v471
      %662 = vst [vmem:[%s181 + $0x38] sm:$0xff] %v473
      %663 = vst [vmem:[%s181 + $0x40] sm:$0xff] %v477
      %664 = vst [vmem:[%s181 + $0x48] sm:$0xff] %v479
      %665 = vst [vmem:[%s181 + $0x50] sm:$0xff] %v481
      %666 = vst [vmem:[%s181 + $0x58] sm:$0xff] %v483
      %667 = vst [vmem:[%s181 + $0x60] sm:$0xff] %v487
      %668 = vst [vmem:[%s181 + $0x68] sm:$0xff] %v489
      %669 = vst [vmem:[%s181 + $0x70] sm:$0xff] %v491
      %670 = vst [vmem:[%s181 + $0x78] sm:$0xff] %v493
      %671 = vst [vmem:[%s181 + $0x80] sm:$0xff] %v497
      %672 = vst [vmem:[%s181 + $0x88] sm:$0xff] %v499
      %673 = vst [vmem:[%s181 + $0x90] sm:$0xff] %v501
      %674 = vst [vmem:[%s181 + $0x98] sm:$0xff] %v503
      %675 = vst [vmem:[%s181 + $0xa0] sm:$0xff] %v507
      %676 = vst [vmem:[%s181 + $0xa8] sm:$0xff] %v509
      %677 = vst [vmem:[%s181 + $0xb0] sm:$0xff] %v511
      %678 = vst [vmem:[%s181 + $0xb8] sm:$0xff] %v513
      %679 = vst [vmem:[%s181 + $0xc0] sm:$0xff] %v517
      %680 = vst [vmem:[%s181 + $0xc8] sm:$0xff] %v519
      %681 = vst [vmem:[%s181 + $0xd0] sm:$0xff] %v521
      %682 = vst [vmem:[%s181 + $0xd8] sm:$0xff] %v523
      %683 = vst [vmem:[%s181 + $0xe0] sm:$0xff] %v527
      %684 = vst [vmem:[%s181 + $0xe8] sm:$0xff] %v529
      %685 = vst [vmem:[%s181 + $0xf0] sm:$0xff] %v531
      %686 = vst [vmem:[%s181 + $0xf8] sm:$0xff] %v533
      %687 = vst [vmem:[%s181 + $0x100] sm:$0xff] %v537
      %688 = vst [vmem:[%s181 + $0x108] sm:$0xff] %v539
      %689 = vst [vmem:[%s181 + $0x110] sm:$0xff] %v541
      %690 = vst [vmem:[%s181 + $0x118] sm:$0xff] %v543
      %691 = vst [vmem:[%s181 + $0x120] sm:$0xff] %v547
      %692 = vst [vmem:[%s181 + $0x128] sm:$0xff] %v549
      %693 = vst [vmem:[%s181 + $0x130] sm:$0xff] %v551
      %694 = vst [vmem:[%s181 + $0x138] sm:$0xff] %v553
      %695 = vst [vmem:[%s181 + $0x140] sm:$0xff] %v557
      %696 = vst [vmem:[%s181 + $0x148] sm:$0xff] %v559
      %697 = vst [vmem:[%s181 + $0x150] sm:$0xff] %v561
      %698 = vst [vmem:[%s181 + $0x158] sm:$0xff] %v563
      %699 = vst [vmem:[%s181 + $0x160] sm:$0xff] %v567
      %700 = vst [vmem:[%s181 + $0x168] sm:$0xff] %v569
      %701 = vst [vmem:[%s181 + $0x170] sm:$0xff] %v571
      %702 = vst [vmem:[%s181 + $0x178] sm:$0xff] %v573
      %703 = vst [vmem:[%s181 + $0x180] sm:$0xff] %v577
      %704 = vst [vmem:[%s181 + $0x188] sm:$0xff] %v579
      %705 = vst [vmem:[%s181 + $0x190] sm:$0xff] %v581
      %706 = vst [vmem:[%s181 + $0x198] sm:$0xff] %v583
      %707 = vst [vmem:[%s181 + $0x1a0] sm:$0xff] %v587
      %708 = vst [vmem:[%s181 + $0x1a8] sm:$0xff] %v589
      %709 = vst [vmem:[%s181 + $0x1b0] sm:$0xff] %v591
      %710 = vst [vmem:[%s181 + $0x1b8] sm:$0xff] %v593
      %711 = vst [vmem:[%s181 + $0x1c0] sm:$0xff] %v597
      %712 = vst [vmem:[%s181 + $0x1c8] sm:$0xff] %v599
      %713 = vst [vmem:[%s181 + $0x1d0] sm:$0xff] %v601
      %714 = vst [vmem:[%s181 + $0x1d8] sm:$0xff] %v603
      %715 = vst [vmem:[%s181 + $0x1e0] sm:$0xff] %v607
      %716 = vst [vmem:[%s181 + $0x1e8] sm:$0xff] %v609
      %717 = vst [vmem:[%s181 + $0x1f0] sm:$0xff] %v611
      %718 = vst [vmem:[%s181 + $0x1f8] sm:$0xff] %v613
      %719 = vst [vmem:[%s181 + $0x200] sm:$0xff] %v617
      %720 = vst [vmem:[%s181 + $0x208] sm:$0xff] %v619
      %721 = vst [vmem:[%s181 + $0x210] sm:$0xff] %v621
      %722 = vst [vmem:[%s181 + $0x218] sm:$0xff] %v623
      %723 = vst [vmem:[%s181 + $0x220] sm:$0xff] %v627
      %724 = vst [vmem:[%s181 + $0x228] sm:$0xff] %v629
      %725 = vst [vmem:[%s181 + $0x230] sm:$0xff] %v631
      %726 = vst [vmem:[%s181 + $0x238] sm:$0xff] %v633
      %727 = vst [vmem:[%s181 + $0x240] sm:$0xff] %v637
      %728 = vst [vmem:[%s181 + $0x248] sm:$0xff] %v639
      %729 = vst [vmem:[%s181 + $0x250] sm:$0xff] %v641
      %730 = vst [vmem:[%s181 + $0x258] sm:$0xff] %v643
      %731 = vst [vmem:[%s181 + $0x260] sm:$0xff] %v647
      %732 = vst [vmem:[%s181 + $0x268] sm:$0xff] %v649
      %733 = vst [vmem:[%s181 + $0x270] sm:$0xff] %v651
      %734 = vst [vmem:[%s181 + $0x278] sm:$0xff] %v653
      %s735 = smul.u32 2, %s18
      %p736 = scmp.lt.s32.totalorder %s17, 1
      %s737 = scalar_select %p736, %s17, 1
      %p738 = scmp.lt.s32.totalorder %s735, 1
      %s739 = scalar_select %p738, %s735, 1
      %s740 = smul.addr %s737, 80
      %s741 = sadd.s32 %s739, %s740
      %s742 = smul.addr %s741, 8
      %s743 = scalar_lea.vmem %s2, %s742
      // Predicated region
      $region29: #{conv_in_pallas.1} parent=27 // pred_check
        %p744 = pneg %p94
      $region30: #{conv_in_pallas.1} parent=27 // pred_check_branch
        %746 = sbr.rel (%p744) target = $region32
      $region31: #{conv_in_pallas.1} parent=27 // pred_region
        %s747 = smul.u32 2, %s18
      $region32: #{conv_in_pallas.1} parent=27 // pred_fallthru
        _
    $region28: #{conv_in_pallas.1} parent=5 // pred_fallthru
      _
    %p748 = scmp.le.s32.totalorder 2, %s8
    // Predicated region
    $region33: #{conv_in_pallas.1} parent=5 // pred_check
      %p749 = pneg %p748
    $region34: #{conv_in_pallas.1} parent=5 // pred_check_branch
      %751 = sbr.rel (%p749) target = $region36
    $region35: #{conv_in_pallas.1} parent=5 // pred_region
      %s752 = ssub.s32 %s8, 2
      // Predicated region
      $region37: #{conv_in_pallas.1} parent=35 // pred_check
        %p753 = pneg %p100
      $region38: #{conv_in_pallas.1} parent=35 // pred_check_branch
        %755 = sbr.rel (%p753) target = $region40
      $region39: #{conv_in_pallas.1} parent=35 // pred_region
        %s756 = smul.u32 2, %s20
        %p757 = scmp.lt.s32.totalorder %s19, 1
        %s758 = scalar_select %p757, %s19, 1
        %p759 = scmp.lt.s32.totalorder %s756, 1
        %s760 = scalar_select %p759, %s756, 1
        %s761 = smul.addr %s758, 80
        %s762 = sadd.s32 %s760, %s761
        %s763 = smul.addr %s762, 8
        %s764 = scalar_lea.vmem %s2, %s763
      $region40: #{conv_in_pallas.1} parent=35 // pred_fallthru
        _
    $region36: #{conv_in_pallas.1} parent=5 // pred_fallthru
      _
  $region6: #{conv_in_pallas.1} parent=0 // loop_footer
    %s12 = sadd.s32 1, %s8
  $region7: #{conv_in_pallas.1} parent=0 // loop_footer_branch
    %7 = sbr.rel target = $region3
  $region8: #{conv_in_pallas.1} parent=0 // loop_exit
    _

</llo_original>
